<compile_context>
chip_gen: v5e
topology: v5e:2x2
jax: 0.10.0
libtpu: 0.0.40
codegen_flags: <defaults>
</compile_context>

<pallas_src>
import numpy as np
import jax
import jax.numpy as jnp
from jax.experimental import pallas as pl
from jax.experimental.pallas import tpu as pltpu


def _round_up(x, m):
    return (x + m - 1) // m * m


def _make_kernel(D, data_resident, use_mxu):
    """Build the tile kernel.

    Refs (in order):
      q_ref   : (TM, D)              query tile (f32)
      dt_ref  : (n_j|1, D, TN)       data^T slabs (f32); resident or streamed
      d2_ref  : (n_j|1, 1, TN)       ||d||^2 slabs (f32), only when use_mxu
      r2_ref  : (TM, 1)              per-query radius^2 (f32, -1 for padding)
      mask_ref: (TM, TN)             0/1 mask tile (int8)
      cnt_ref : (TM, 1)              per-query neighbor count (int32),
                                     accumulated across the j (N) grid axis.
    """

    def kernel(*refs):
        if use_mxu:
            q_ref, dt_ref, d2_ref, r2_ref, mask_ref, cnt_ref = refs
        else:
            q_ref, dt_ref, r2_ref, mask_ref, cnt_ref = refs

        j = pl.program_id(1)

        @pl.when(j == 0)
        def _():
            cnt_ref[...] = jnp.zeros_like(cnt_ref)

        q = q_ref[...]                                   # (TM, D) f32
        r2 = r2_ref[...]                                 # (TM, 1) f32
        # Leading-axis dynamic index selects the column slab (resident case);
        # in the streaming fallback the block already is the current slab.
        dt = dt_ref[j] if data_resident else dt_ref[0]   # (D, TN)

        if use_mxu:
            # Moderate/large D: expansion formula, q.dt on the MXU, d^2
            # precomputed in the wrapper.  NOTE: cancellation can flip
            # classifications within ~1e-4 of the radius boundary.
            d2 = d2_ref[j] if data_resident else d2_ref[0]       # (1, TN)
            q2 = jnp.sum(q * q, axis=-1, keepdims=True)          # (TM, 1)
            qd = jnp.dot(q, dt, preferred_element_type=jnp.float32)
            sq = jnp.maximum(q2 + d2 - 2.0 * qd, 0.0)
        else:
            # Small D (typical D=2/3): direct unrolled squared difference on
            # the VPU.  Exact near the radius boundary, no padded-K matmul.
            diff = q[:, 0:1] - dt[0:1, :]                        # (TM, TN)
            sq = diff * diff
            for d in range(1, D):
                diff = q[:, d:d + 1] - dt[d:d + 1, :]
                sq = sq + diff * diff

        within = sq <= r2                                        # (TM, TN) bool
        # Single select feeds the int8 store; the count reduces the predicate
        # with an exact int32 accumulate (no f32 round trip).
        mask_ref[...] = within.astype(jnp.int8)
        cnt_ref[...] += jnp.sum(within.astype(jnp.int32), axis=-1,
                                keepdims=True)

    return kernel


def neighbor_mask_and_counts(queries, data, radius, *, tm=None, tn=None,
                             max_resident_bytes=None):
    """Pallas kernel wrapper.

    Returns:
      mask   : (M, N) int8, 1 where ||query_i - data_j|| <= radius_i
      counts : (M,)  int32 per-query neighbor counts
    """
    queries = jnp.asarray(queries, jnp.float32)
    data = jnp.asarray(data, jnp.float32)
    M, D = queries.shape
    N, D2 = data.shape
    assert D == D2

    radius = jnp.asarray(radius, jnp.float32)
    if radius.ndim == 0:
        radius_v = jnp.full((M,), radius, jnp.float32)
    else:
        if radius.ndim != 1 or radius.shape[0] != M:
            raise ValueError(
                "If radius is an array, it must be 1-D and match num_queries.")
        radius_v = radius

    # --- generation-aware VMEM sizing ------------------------------------
    try:
        vmem_cap = int(pltpu.get_tpu_info().vmem_capacity_bytes)
    except Exception:
        vmem_cap = 64 << 20                      # conservative (v7x-sized)
    vmem_scope_cap = max(32 << 20, int(vmem_cap * 0.70))
    if max_resident_bytes is None:
        # physical, single-copy footprint allowed for resident data^T (+d^2)
        resident_cap = min(vmem_cap // 5, 24 << 20)   # ~12.8 MiB v7x, 24 MiB v5e/v6e
    else:
        resident_cap = int(max_resident_bytes)

    use_mxu = D >= 8
    padD = _round_up(D, 8)

    # --- tile selection ---------------------------------------------------
    # tm: aim for >= 4 tiles along the "parallel" i axis (keeps both v7x
    #     TensorCores busy); multiple of 32 for int8 sublane tiling.
    if tm is None:
        tm = min(512, max(32, _round_up((M + 3) // 4, 32)))
    else:
        tm = max(32, _round_up(tm, 32))
    # tn: as wide as the per-tn VMEM working set allows (fewer ~0.35us grid
    #     steps, unmasked lane-dense stores); multiple of 128.
    if tn is None:
        per_tn_bytes = 2 * tm + 2 * 4 * (padD + (8 if use_mxu else 0))
        tn_cap = max(128, ((vmem_cap // 6) // per_tn_bytes) // 128 * 128)
        tn = min(_round_up(N, 128), tn_cap)
    else:
        tn = _round_up(tn, 128)

    M_pad = _round_up(M, tm)
    N_pad = _round_up(N, tn)
    n_i = M_pad // tm
    n_j = N_pad // tn
    grid = (n_i, n_j)

    # --- padding: far-away padded data points never match; padded query
    #     rows get radius^2 = -1 (never match) and are sliced off anyway.
    q_pad = jnp.zeros((M_pad, D), jnp.float32).at[:M].set(queries)
    d_pad = jnp.full((N_pad, D), 1e9, jnp.float32).at[:N].set(data)
    r2 = jnp.where(radius_v >= 0.0, radius_v * radius_v, -1.0)
    r2_pad = jnp.full((M_pad, 1), -1.0, jnp.float32).at[:M, 0].set(r2)

    # data^T laid out as (n_j, D, tn): lane-dense on columns; the column slab
    # is selected with a leading-axis index inside the kernel.
    data_t = d_pad.T.reshape(D, n_j, tn).transpose(1, 0, 2)      # (n_j, D, tn)

    inputs = [q_pad, data_t]
    if use_mxu:
        d2_t = jnp.sum(d_pad * d_pad, axis=-1).reshape(n_j, 1, tn)
        inputs.append(d2_t)
    inputs.append(r2_pad)

    # --- residency decision on physical (sublane-padded) footprints -------
    data_phys = n_j * padD * tn * 4                 # (n_j, D, tn): D pads to 8
    d2_phys = (n_j * 8 * tn * 4) if use_mxu else 0  # (n_j, 1, tn): 1 pads to 8
    data_resident = (data_phys + d2_phys) <= resident_cap

    if data_resident:
        # Whole array resident: constant index map, DMA'd from HBM once and
        # single-buffered (the block never changes).
        data_spec = pl.BlockSpec((n_j, D, tn), lambda i, j: (0, 0, 0),
                                 pipeline_mode=pl.Buffered(1))
        d2_spec = pl.BlockSpec((n_j, 1, tn), lambda i, j: (0, 0, 0),
                               pipeline_mode=pl.Buffered(1))
        data_bytes = data_phys + d2_phys
    else:
        # Streaming fallback for very large N: each (i, j) step re-reads one
        # (D, tn) slab.  Extra HBM reads are ~n_i * D * N * 4 bytes, i.e. a
        # few % of the (M, N) int8 mask writeback, so no chunking machinery.
        data_spec = pl.BlockSpec((1, D, tn), lambda i, j: (j, 0, 0))
        d2_spec = pl.BlockSpec((1, 1, tn), lambda i, j: (j, 0, 0))
        data_bytes = 2 * 4 * tn * (padD + (8 if use_mxu else 0))

    in_specs = [pl.BlockSpec((tm, D), lambda i, j: (i, 0)), data_spec]
    if use_mxu:
        in_specs.append(d2_spec)
    in_specs.append(pl.BlockSpec((tm, 1), lambda i, j: (i, 0)))

    # --- physical VMEM budget (lane dim pads to 128; double-buffered where
    #     the pipeline double-buffers) ------------------------------------
    needed = (2 * tm * 128 * 4          # query tile  (D lane-pads to 128)
              + 2 * tm * 128 * 4        # radius^2 tile
              + 2 * tm * 128 * 4        # int32 counts tile
              + 2 * tm * tn             # int8 mask tile
              + data_bytes)
    vmem_limit = int(min(max(32 << 20, needed + (6 << 20)), vmem_scope_cap))

    kernel = _make_kernel(D=D, data_resident=data_resident, use_mxu=use_mxu)

    mask, counts = pl.pallas_call(
        kernel,
        out_shape=(
            jax.ShapeDtypeStruct((M_pad, N_pad), jnp.int8),
            jax.ShapeDtypeStruct((M_pad, 1), jnp.int32),
        ),
        grid_spec=pltpu.PrefetchScalarGridSpec(
            num_scalar_prefetch=0,
            grid=grid,
            in_specs=in_specs,
            out_specs=[
                pl.BlockSpec((tm, tn), lambda i, j: (i, j)),   # int8 mask tile
                pl.BlockSpec((tm, 1), lambda i, j: (i, 0)),    # counts (resident over j)
            ],
        ),
        compiler_params=pltpu.CompilerParams(
            dimension_semantics=("parallel", "arbitrary"),
            vmem_limit_bytes=vmem_limit,
        ),
    )(*inputs)

    return mask[:M, :N], counts[:M, 0]


def neighbor_search(queries, data, radius):
    """Full NeighborSearch.forward equivalent (native path), CSR output.

    Returns ({'neighbors_index', 'neighbors_row_splits'} as numpy int64, mask).
    """
    N = data.shape[0]

    mask, counts = neighbor_mask_and_counts(queries, data, radius)
    mask, counts = jax.block_until_ready((mask, counts))

    counts_np = np.asarray(counts).astype(np.int64)
    row_splits = np.concatenate([np.zeros(1, np.int64), np.cumsum(counts_np)])

    # TODO(synk): variable-length nonzero / CSR index extraction (and int64
    # outputs) have no clean on-device Pallas equivalent; done host-side on
    # the kernel's int8 mask.
    mask_np = np.asarray(mask)
    flat_idx = np.flatnonzero(mask_np.reshape(-1))
    neighbors_index = (flat_idx % N).astype(np.int64)

    return {
        "neighbors_index": neighbors_index,
        "neighbors_row_splits": row_splits,
    }, mask


if __name__ == "__main__":
    key = jax.random.PRNGKey(0)
    k1, k2, k3 = jax.random.split(key, 3)

    # Small, deliberately non-multiple shapes to exercise padding.
    M, N, D = 70, 300, 3
    queries = jax.random.uniform(k1, (M, D), jnp.float32)
    data = jax.random.uniform(k2, (N, D), jnp.float32)
    radius = 0.25 + 0.15 * jax.random.uniform(k3, (M,), jnp.float32)

    out, mask = neighbor_search(queries, data, radius)

    # Forced small tiles + forced streaming fallback: exercises the multi-block
    # grid, padded edges and cross-j count accumulation; must match exactly.
    mask_s, counts_s = neighbor_mask_and_counts(
        queries, data, radius, tm=32, tn=128, max_resident_bytes=0)
    mask_s, counts_s = jax.block_until_ready((mask_s, counts_s))
    assert np.array_equal(np.asarray(mask), np.asarray(mask_s))

    # --- numpy reference (ignore pairs within 1e-4 of the radius boundary) ---
    q_np = np.asarray(queries, np.float64)
    d_np = np.asarray(data, np.float64)
    r_np = np.asarray(radius, np.float64).reshape(-1, 1)
    dist_ref = np.sqrt(((q_np[:, None, :] - d_np[None, :, :]) ** 2).sum(-1))
    mask_ref = dist_ref <= r_np
    mask_np = np.asarray(mask) != 0
    far = np.abs(dist_ref - r_np) > 1e-4
    assert np.array_equal(mask_np[far], mask_ref[far])

    splits = out["neighbors_row_splits"]
    idx = out["neighbors_index"]
    assert splits.shape == (M + 1,)
    assert splits.dtype == np.int64 and idx.dtype == np.int64
    assert splits[0] == 0 and splits[-1] == idx.shape[0]
    assert np.all(np.diff(splits) >= 0)
    # kernel counts must agree exactly with the kernel mask
    assert np.array_equal(np.diff(splits), mask_np.sum(axis=1))
    assert np.array_equal(np.diff(splits), np.asarray(counts_s, np.int64))
    # CSR rows reproduce the mask, row-major (torch.nonzero ordering)
    for i in range(M):
        row_cols = idx[splits[i]:splits[i + 1]]
        assert np.array_equal(row_cols, np.flatnonzero(mask_np[i]))

    # Scalar-radius path (float radius like the PyTorch module allows).
    out_sc, _ = neighbor_search(queries, data, 0.3)
    assert out_sc["neighbors_row_splits"].shape == (M + 1,)

    # MXU expansion path (D >= 8); boundary band excluded (cancellation).
    k4, k5 = jax.random.split(jax.random.PRNGKey(1), 2)
    q8 = jax.random.uniform(k4, (64, 8), jnp.float32)
    d8 = jax.random.uniform(k5, (256, 8), jnp.float32)
    m8, c8 = neighbor_mask_and_counts(q8, d8, 0.9)
    m8, c8 = jax.block_until_ready((m8, c8))
    dist8 = np.sqrt(((np.asarray(q8, np.float64)[:, None, :]
                      - np.asarray(d8, np.float64)[None, :, :]) ** 2).sum(-1))
    far8 = np.abs(dist8 - 0.9) > 1e-3
    assert np.array_equal((np.asarray(m8) != 0)[far8], (dist8 <= 0.9)[far8])
    assert np.array_equal(np.asarray(c8), (np.asarray(m8) != 0).sum(axis=1))

    print("KERNEL_OK")
</pallas_src>

<mosaic_0001>
module attributes {stable_mosaic.version = 11 : i64} {
  func.func @kernel(%arg0: i32, %arg1: i32, %arg2: memref<32x3xf32, #tpu.memory_space<vmem>>, %arg3: memref<1x3x384xf32, #tpu.memory_space<vmem>>, %arg4: memref<32x1xf32, #tpu.memory_space<vmem>>, %arg5: memref<32x384xi8, #tpu.memory_space<vmem>>, %arg6: memref<32x1xi32, #tpu.memory_space<vmem>>) attributes {dimension_semantics = [#tpu.dimension_semantics<parallel>, #tpu.dimension_semantics<arbitrary>], iteration_bounds = array<i64: 3, 1>, scalar_prefetch = 0 : i64, scratch_operands = 0 : i64, tpu.core_type = #tpu.core_type<tc>, window_params = [{transform_indices = @transform_0, window_bounds = array<i64: 32, 3>}, {pipeline_mode = #tpu.pipeline_mode<synchronous>, transform_indices = @transform_1, window_bounds = array<i64: 1, 3, 384>}, {transform_indices = @transform_2, window_bounds = array<i64: 32, 1>}, {transform_indices = @transform_3, window_bounds = array<i64: 32, 384>}, {transform_indices = @transform_4, window_bounds = array<i64: 32, 1>}]} {
    %c0_i32 = arith.constant 0 : i32
    %0 = arith.cmpi eq, %arg1, %c0_i32 : i32
    %1 = arith.extui %0 : i1 to i32
    %c0_i32_0 = arith.constant 0 : i32
    %2 = arith.cmpi ne, %1, %c0_i32_0 : i32
    scf.if %2 {
      %c0_i32_12 = arith.constant 0 : i32
      %38 = vector.broadcast %c0_i32_12 : i32 to vector<32x1xi32>
      %c0_13 = arith.constant 0 : index
      %c0_14 = arith.constant 0 : index
      %39 = vector.load %arg6[%c0_13, %c0_14] : memref<32x1xi32, #tpu.memory_space<vmem>>, vector<32x1xi32>
      tpu.vector_store %arg6[%c0_13, %c0_14], %38 {strides = array<i32>} : memref<32x1xi32, #tpu.memory_space<vmem>>, vector<32x1xi32>,
    } else {
    }
    %c0 = arith.constant 0 : index
    %c0_1 = arith.constant 0 : index
    %3 = vector.load %arg2[%c0, %c0_1] : memref<32x3xf32, #tpu.memory_space<vmem>>, vector<32x3xf32>
    %c0_2 = arith.constant 0 : index
    %c0_3 = arith.constant 0 : index
    %4 = vector.load %arg4[%c0_2, %c0_3] : memref<32x1xf32, #tpu.memory_space<vmem>>, vector<32x1xf32>
    %5 = arith.index_cast %arg1 : i32 to index
    %c0_4 = arith.constant 0 : index
    %c0_5 = arith.constant 0 : index
    %6 = vector.load %arg3[%5, %c0_4, %c0_5] : memref<1x3x384xf32, #tpu.memory_space<vmem>>, vector<1x3x384xf32>
    %7 = vector.shape_cast %6 : vector<1x3x384xf32> to vector<3x384xf32>
    %8 = vector.extract_strided_slice %3 {offsets = [0, 0], sizes = [32, 1], strides = [1, 1]} : vector<32x3xf32> to vector<32x1xf32>
    %9 = vector.extract_strided_slice %7 {offsets = [0, 0], sizes = [1, 384], strides = [1, 1]} : vector<3x384xf32> to vector<1x384xf32>
    %10 = vector.broadcast %8 : vector<32x1xf32> to vector<32x384xf32>
    %11 = vector.broadcast %9 : vector<1x384xf32> to vector<32x384xf32>
    %12 = arith.subf %10, %11 : vector<32x384xf32>
    %13 = arith.mulf %12, %12 : vector<32x384xf32>
    %14 = vector.extract_strided_slice %3 {offsets = [0, 1], sizes = [32, 1], strides = [1, 1]} : vector<32x3xf32> to vector<32x1xf32>
    %15 = vector.extract_strided_slice %7 {offsets = [1, 0], sizes = [1, 384], strides = [1, 1]} : vector<3x384xf32> to vector<1x384xf32>
    %16 = vector.broadcast %14 : vector<32x1xf32> to vector<32x384xf32>
    %17 = vector.broadcast %15 : vector<1x384xf32> to vector<32x384xf32>
    %18 = arith.subf %16, %17 : vector<32x384xf32>
    %19 = arith.mulf %18, %18 : vector<32x384xf32>
    %20 = arith.addf %13, %19 : vector<32x384xf32>
    %21 = vector.extract_strided_slice %3 {offsets = [0, 2], sizes = [32, 1], strides = [1, 1]} : vector<32x3xf32> to vector<32x1xf32>
    %22 = vector.extract_strided_slice %7 {offsets = [2, 0], sizes = [1, 384], strides = [1, 1]} : vector<3x384xf32> to vector<1x384xf32>
    %23 = vector.broadcast %21 : vector<32x1xf32> to vector<32x384xf32>
    %24 = vector.broadcast %22 : vector<1x384xf32> to vector<32x384xf32>
    %25 = arith.subf %23, %24 : vector<32x384xf32>
    %26 = arith.mulf %25, %25 : vector<32x384xf32>
    %27 = arith.addf %20, %26 : vector<32x384xf32>
    %28 = vector.broadcast %4 : vector<32x1xf32> to vector<32x384xf32>
    %29 = arith.cmpf ole, %27, %28 : vector<32x384xf32>
    %30 = arith.extui %29 : vector<32x384xi1> to vector<32x384xi8>
    %c0_6 = arith.constant 0 : index
    %c0_7 = arith.constant 0 : index
    %31 = vector.load %arg5[%c0_6, %c0_7] : memref<32x384xi8, #tpu.memory_space<vmem>>, vector<32x384xi8>
    tpu.vector_store %arg5[%c0_6, %c0_7], %30 {strides = array<i32>} : memref<32x384xi8, #tpu.memory_space<vmem>>, vector<32x384xi8>,
    %c0_8 = arith.constant 0 : index
    %c0_9 = arith.constant 0 : index
    %32 = vector.load %arg6[%c0_8, %c0_9] : memref<32x1xi32, #tpu.memory_space<vmem>>, vector<32x1xi32>
    %33 = arith.extui %29 : vector<32x384xi1> to vector<32x384xi32>
    %cst = arith.constant dense<0> : vector<32xi32>
    %34 = vector.multi_reduction <add>, %33, %cst [1] : vector<32x384xi32> to vector<32xi32>
    %35 = vector.shape_cast %34 : vector<32xi32> to vector<32x1xi32>
    %36 = arith.addi %32, %35 : vector<32x1xi32>
    %c0_10 = arith.constant 0 : index
    %c0_11 = arith.constant 0 : index
    %37 = vector.load %arg6[%c0_10, %c0_11] : memref<32x1xi32, #tpu.memory_space<vmem>>, vector<32x1xi32>
    tpu.vector_store %arg6[%c0_10, %c0_11], %36 {strides = array<i32>} : memref<32x1xi32, #tpu.memory_space<vmem>>, vector<32x1xi32>,
    return
  }
  func.func @transform_0(%arg0: i32, %arg1: i32) -> (i32, i32) {
    %c0_i32 = arith.constant 0 : i32
    %c0_i32_0 = arith.constant 0 : i32
    return %arg0, %c0_i32 : i32, i32
  }
  func.func @transform_1(%arg0: i32, %arg1: i32) -> (i32, i32, i32) {
    %c0_i32 = arith.constant 0 : i32
    %c0_i32_0 = arith.constant 0 : i32
    %c0_i32_1 = arith.constant 0 : i32
    %c0_i32_2 = arith.constant 0 : i32
    return %c0_i32, %c0_i32_0, %c0_i32_1 : i32, i32, i32
  }
  func.func @transform_2(%arg0: i32, %arg1: i32) -> (i32, i32) {
    %c0_i32 = arith.constant 0 : i32
    %c0_i32_0 = arith.constant 0 : i32
    return %arg0, %c0_i32 : i32, i32
  }
  func.func @transform_3(%arg0: i32, %arg1: i32) -> (i32, i32) {
    %c0_i32 = arith.constant 0 : i32
    return %arg0, %arg1 : i32, i32
  }
  func.func @transform_4(%arg0: i32, %arg1: i32) -> (i32, i32) {
    %c0_i32 = arith.constant 0 : i32
    %c0_i32_0 = arith.constant 0 : i32
    return %arg0, %c0_i32 : i32, i32
  }
}

</mosaic_0001>

<llo_original>
// kernel: tpu_custom_call.1
$region0: #{tpu_custom_call.1}
  #allocation0 [shape = 'u32[]', space=smem, size = 0x4, offset = 0x4, fixed_abs, tag = 'smem constant byte address 0x4 - core index']
  #allocation1 [shape = 'u32[72,128]{1,0:T(1,128)}', space=vmem, size = 0x9000, scoped, tag = 'internal scratch']
  %s0 = inlined_call_operand.vmem [shape: f32[96,3], index: 0, kind: input, shape index: {}]
  %s1 = inlined_call_operand.vmem [shape: f32[1,3,384], index: 1, kind: input, shape index: {}]
  %s2 = inlined_call_operand.vmem [shape: f32[96,1], index: 2, kind: input, shape index: {}]
  %s3 = inlined_call_operand.hbm [shape: s8[96,384], index: 3, kind: output, shape index: {0}]
  %s4 = inlined_call_operand.vmem [shape: s32[96,1], index: 4, kind: output, shape index: {1}]
  %5 = xla_tuple %s3, %s4
  %s6 = sld [smem:[#allocation0]]
  $region57: #{tpu_custom_call.1} parent=0
    _
  %s8 = ssub.s32 1, %s6
  %s9 = scalar_select 0, %s8, %s6
  $region1: #{tpu_custom_call.1} parent=0
    #allocation2 [shape = 'u8[24576]{0}', space=vmem, size = 0x6000, scoped, tag = 'output window, operand 0']
    #allocation3 [shape = 's32[2]{0}', space=sflag, size = 0x8, scoped, tag = 'scoped memory for tpu_custom_call.1']
    %10 = vsyncpa [#allocation3], 0
    %s11 = scalar_lea.sflag [#allocation3], 1
    %12 = vsyncpa %s11, 0
    loop: start=0, step=1, limit=5
    $region2: #{tpu_custom_call.1} parent=1 // loop_pre_header
      _
    $region3: #{tpu_custom_call.1} parent=1 // loop_header
      %s14 = sphi 0, %s18
      %p15 = scmp.ge.s32.totalorder %s14, 5
      %s21 = sphi 0, %s33
      %s22 = sphi 0, %s29
      %s23 = sphi 0, %s21
      %s24 = sphi 0, %s22
      %s25 = sphi 0, %s23
      %s26 = sphi 0, %s24
      %s36 = sphi 0, %s38
      %s39 = sphi 0, %s36
      %s40 = sphi 0, %s39
      %s56 = sphi 0, %s40
      %s60 = sphi 0, %s60
      %s62 = sphi 0, %s60
      %s63 = sphi 0, %s62
      %s77 = sphi 0, %s63
      %s83 = sphi 0, %s85
      %s86 = sphi 0, %s83
      %s87 = sphi 0, %s86
      %s103 = sphi 0, %s87
      %s111 = sphi 0, %s113
      %s114 = sphi 0, %s111
      %s115 = sphi 0, %s114
      %s131 = sphi 0, %s115
      %s137 = sphi 0, %s139
      %s140 = sphi 0, %s137
      %s141 = sphi 0, %s140
      %s157 = sphi 0, %s141
    $region4: #{tpu_custom_call.1} parent=1 // loop_header_branch
      %17 = sbr.rel (%p15) target = $region8
    $region5: #{tpu_custom_call.1} parent=1 // loop_body
      %s19 = ssub.s32 %s14, 1
      %s20 = ssub.s32 %s14, 2
      %s27 = sadd.s32 1, %s22
      %p28 = scmp.ge.s32.totalorder %s27, 1
      %s29 = scalar_select %p28, 0, %s27
      %s30 = sadd.s32 1, %s21
      %s31 = scalar_select %p28, %s30, %s21
      %p32 = scmp.ge.s32.totalorder %s31, 3
      %s33 = scalar_select %p32, 0, %s31
      %s34 = ssub.s32 %s21, %s33
      %p35 = scmp.eq.s32.totalorder %s34, 0
      %s37 = sadd.s32 %s36, 1
      %s38 = scalar_select %p35, %s36, %s37
      %p41 = pneg %p35
      %p42 = scmp.eq.s32.totalorder %s14, 2
      %p43 = por %p41, %p42
      %p44 = scmp.ne.s32.totalorder %s36, %s39
      %p45 = scmp.eq.s32.totalorder %s14, 0
      %p46 = por %p44, %p45
      %p47 = scmp.ne.s32.totalorder %s36, %s39
      %p48 = scmp.eq.s32.totalorder %s19, 2
      %p49 = por %p47, %p48
      %p50 = scmp.ne.s32.totalorder %s39, %s40
      %p51 = scmp.eq.s32.totalorder %s19, 0
      %p52 = por %p50, %p51
      %p53 = scmp.ne.s32.totalorder %s39, %s40
      %p54 = scmp.eq.s32.totalorder %s20, 2
      %p55 = por %p53, %p54
      %p57 = scmp.ne.s32.totalorder %s40, %s56
      %p58 = scmp.eq.s32.totalorder %s20, 0
      %p59 = por %p57, %p58
      %s61 = sadd.s32 %s60, 1
      %p64 = scmp.eq.s32.totalorder %s14, 2
      %p65 = scmp.ne.s32.totalorder %s60, %s62
      %p66 = scmp.eq.s32.totalorder %s14, 0
      %p67 = por %p65, %p66
      %p68 = scmp.ne.s32.totalorder %s60, %s62
      %p69 = scmp.eq.s32.totalorder %s19, 2
      %p70 = por %p68, %p69
      %p71 = scmp.ne.s32.totalorder %s62, %s63
      %p72 = scmp.eq.s32.totalorder %s19, 0
      %p73 = por %p71, %p72
      %p74 = scmp.ne.s32.totalorder %s62, %s63
      %p75 = scmp.eq.s32.totalorder %s20, 2
      %p76 = por %p74, %p75
      %p78 = scmp.ne.s32.totalorder %s63, %s77
      %p79 = scmp.eq.s32.totalorder %s20, 0
      %p80 = por %p78, %p79
      %s81 = ssub.s32 %s21, %s33
      %p82 = scmp.eq.s32.totalorder %s81, 0
      %s84 = sadd.s32 %s83, 1
      %s85 = scalar_select %p82, %s83, %s84
      %p88 = pneg %p82
      %p89 = scmp.eq.s32.totalorder %s14, 2
      %p90 = por %p88, %p89
      %p91 = scmp.ne.s32.totalorder %s83, %s86
      %p92 = scmp.eq.s32.totalorder %s14, 0
      %p93 = por %p91, %p92
      %p94 = scmp.ne.s32.totalorder %s83, %s86
      %p95 = scmp.eq.s32.totalorder %s19, 2
      %p96 = por %p94, %p95
      %p97 = scmp.ne.s32.totalorder %s86, %s87
      %p98 = scmp.eq.s32.totalorder %s19, 0
      %p99 = por %p97, %p98
      %p100 = scmp.ne.s32.totalorder %s86, %s87
      %p101 = scmp.eq.s32.totalorder %s20, 2
      %p102 = por %p100, %p101
      %p104 = scmp.ne.s32.totalorder %s87, %s103
      %p105 = scmp.eq.s32.totalorder %s20, 0
      %p106 = por %p104, %p105
      %s107 = ssub.s32 %s21, %s33
      %s108 = ssub.s32 %s22, %s29
      %s109 = sor.u32 %s107, %s108
      %p110 = scmp.eq.s32.totalorder %s109, 0
      %s112 = sadd.s32 %s111, 1
      %s113 = scalar_select %p110, %s111, %s112
      %p116 = pneg %p110
      %p117 = scmp.eq.s32.totalorder %s14, 2
      %p118 = por %p116, %p117
      %p119 = scmp.ne.s32.totalorder %s111, %s114
      %p120 = scmp.eq.s32.totalorder %s14, 0
      %p121 = por %p119, %p120
      %p122 = scmp.ne.s32.totalorder %s111, %s114
      %p123 = scmp.eq.s32.totalorder %s19, 2
      %p124 = por %p122, %p123
      %p125 = scmp.ne.s32.totalorder %s114, %s115
      %p126 = scmp.eq.s32.totalorder %s19, 0
      %p127 = por %p125, %p126
      %p128 = scmp.ne.s32.totalorder %s114, %s115
      %p129 = scmp.eq.s32.totalorder %s20, 2
      %p130 = por %p128, %p129
      %p132 = scmp.ne.s32.totalorder %s115, %s131
      %p133 = scmp.eq.s32.totalorder %s20, 0
      %p134 = por %p132, %p133
      %s135 = ssub.s32 %s21, %s33
      %p136 = scmp.eq.s32.totalorder %s135, 0
      %s138 = sadd.s32 %s137, 1
      %s139 = scalar_select %p136, %s137, %s138
      %p142 = pneg %p136
      %p143 = scmp.eq.s32.totalorder %s14, 2
      %p144 = por %p142, %p143
      %p145 = scmp.ne.s32.totalorder %s137, %s140
      %p146 = scmp.eq.s32.totalorder %s14, 0
      %p147 = por %p145, %p146
      %p148 = scmp.ne.s32.totalorder %s137, %s140
      %p149 = scmp.eq.s32.totalorder %s19, 2
      %p150 = por %p148, %p149
      %p151 = scmp.ne.s32.totalorder %s140, %s141
      %p152 = scmp.eq.s32.totalorder %s19, 0
      %p153 = por %p151, %p152
      %p154 = scmp.ne.s32.totalorder %s140, %s141
      %p155 = scmp.eq.s32.totalorder %s20, 2
      %p156 = por %p154, %p155
      %p158 = scmp.ne.s32.totalorder %s141, %s157
      %p159 = scmp.eq.s32.totalorder %s20, 0
      %p160 = por %p158, %p159
      %p161 = scmp.le.s32.totalorder 1, %s14
      %p162 = scmp.lt.s32.totalorder %s14, 4
      %p163 = pnand %p161, %p162
      %p164 = pneg %p163
      // Predicated region
      $region9: #{tpu_custom_call.1} parent=5 // pred_check
        _
      $region10: #{tpu_custom_call.1} parent=5 // pred_check_branch
        %166 = sbr.rel (%p163) target = $region12
      $region11: #{tpu_custom_call.1} parent=5 // pred_region
        %s167 = ssub.s32 %s14, 1
        // Predicated region
        $region13: #{tpu_custom_call.1} parent=11 // pred_check
          %p168 = pneg %p73
        $region14: #{tpu_custom_call.1} parent=11 // pred_check_branch
          %170 = sbr.rel (%p168) target = $region16
        $region15: #{tpu_custom_call.1} parent=11 // pred_region
          _
        $region16: #{tpu_custom_call.1} parent=11 // pred_fallthru
          _
      $region12: #{tpu_custom_call.1} parent=5 // pred_fallthru
        _
      %p171 = scmp.lt.s32.totalorder %s14, 3
      // Predicated region
      $region17: #{tpu_custom_call.1} parent=5 // pred_check
        %p172 = pneg %p171
      $region18: #{tpu_custom_call.1} parent=5 // pred_check_branch
        %174 = sbr.rel (%p172) target = $region20
      $region19: #{tpu_custom_call.1} parent=5 // pred_region
        // Predicated region
        $region21: #{tpu_custom_call.1} parent=19 // pred_check
          %p175 = pneg %p46
        $region22: #{tpu_custom_call.1} parent=19 // pred_check_branch
          %177 = sbr.rel (%p175) target = $region24
        $region23: #{tpu_custom_call.1} parent=19 // pred_region
          %s178 = smul.u32 4, %s21
          %p179 = scmp.lt.s32.totalorder %s178, 11
          %s180 = scalar_select %p179, %s178, 11
          %s181 = smul.addr %s180, 8
          %s182 = scalar_lea.vmem %s0, %s181
          %s183 = smul.u32 4, %s21
        $region24: #{tpu_custom_call.1} parent=19 // pred_fallthru
          _
        // Predicated region
        $region25: #{tpu_custom_call.1} parent=19 // pred_check
          %p184 = pneg %p93
        $region26: #{tpu_custom_call.1} parent=19 // pred_check_branch
          %186 = sbr.rel (%p184) target = $region28
        $region27: #{tpu_custom_call.1} parent=19 // pred_region
          %s187 = smul.u32 4, %s21
          %p188 = scmp.lt.s32.totalorder %s187, 11
          %s189 = scalar_select %p188, %s187, 11
          %s190 = smul.addr %s189, 8
          %s191 = scalar_lea.vmem %s2, %s190
          %s192 = smul.u32 4, %s21
        $region28: #{tpu_custom_call.1} parent=19 // pred_fallthru
          _
      $region20: #{tpu_custom_call.1} parent=5 // pred_fallthru
        _
      %p193 = scmp.le.s32.totalorder 1, %s14
      %p194 = scmp.lt.s32.totalorder %s14, 4
      %p195 = pnand %p193, %p194
      %p196 = pneg %p195
      // Predicated region
      $region29: #{tpu_custom_call.1} parent=5 // pred_check
        _
      $region30: #{tpu_custom_call.1} parent=5 // pred_check_branch
        %198 = sbr.rel (%p195) target = $region32
      $region31: #{tpu_custom_call.1} parent=5 // pred_region
        %s199 = ssub.s32 %s14, 1
        %s200 = smul.u32 4, %s23
        %p201 = scmp.lt.s32.totalorder %s200, 11
        %s202 = scalar_select %p201, %s200, 11
        %s203 = smul.addr %s202, 8
        %s204 = scalar_lea.vmem %s0, %s203
        %p205 = pneg %p52
        %p206 = pneg %p49
        %p207 = pneg %p73
        %p208 = pneg %p70
        %s209 = smul.u32 4, %s23
        %p210 = scmp.lt.s32.totalorder %s209, 11
        %s211 = scalar_select %p210, %s209, 11
        %s212 = smul.addr %s211, 8
        %s213 = scalar_lea.vmem %s2, %s212
        %p214 = pneg %p99
        %p215 = pneg %p96
        %p216 = pneg %p127
        %p217 = pneg %p124
        %s218 = sand.u32 %s114, 1
        %s219 = scalar_lea.sflag [#allocation3], %s218
        %s220 = sand.u32 %s114, 1
        %s221 = smul.addr %s220, 24
        %s222 = scalar_lea.vmem [#allocation2], %s221
        %p223 = pneg %p153
        %p224 = pneg %p150
        %s225 = smul.u32 4, %s23
        %p226 = scmp.lt.s32.totalorder %s225, 11
        %s227 = scalar_select %p226, %s225, 11
        %s228 = smul.addr %s227, 8
        %s229 = scalar_lea.vmem %s4, %s228
        %s230 = smul.u32 4, %s23
        %p231 = scmp.lt.s32.totalorder %s230, 11
        %s232 = scalar_select %p231, %s230, 11
        %s233 = smul.addr %s232, 8
        %s234 = scalar_lea.vmem %s0, %s233
        %s235 = smul.u32 4, %s23
        %s236 = smul.u32 4, %s23
        %p237 = scmp.lt.s32.totalorder %s236, 11
        %s238 = scalar_select %p237, %s236, 11
        %s239 = smul.addr %s238, 8
        %s240 = scalar_lea.vmem %s2, %s239
        %s241 = smul.u32 4, %s23
        %s242 = smul.u32 3, %s24
        %s243 = smul.u32 4, %s23
        %p244 = scmp.lt.s32.totalorder %s243, 11
        %s245 = scalar_select %p244, %s243, 11
        %s246 = smul.addr %s245, 8
        %s247 = scalar_lea.vmem %s4, %s246
        %s248 = smul.u32 4, %s23
        %p251 = scmp.eq.s32.totalorder %s24, 0
        // Predicated region
        $region33: #{tpu_custom_call.1} parent=31 // pred_check
          %p252 = pneg %p251
        $region34: #{tpu_custom_call.1} parent=31 // pred_check_branch
          %254 = sbr.rel (%p252) target = $region36
        $region35: #{tpu_custom_call.1} parent=31 // pred_region
          %vm255 = vcmask 7168
          %256 = vst.msk [vmem:[%s247] sm:$0xff] %vm255, 0
          %257 = vst.msk [vmem:[%s247 + $0x8] sm:$0xff] %vm255, 0
          %258 = vst.msk [vmem:[%s247 + $0x10] sm:$0xff] %vm255, 0
          %259 = vst.msk [vmem:[%s247 + $0x18] sm:$0xff] %vm255, 0
        $region36: #{tpu_custom_call.1} parent=31 // pred_fallthru
          _
        %v260 = vld [vmem:[%s234] sm:$0xff]
        %v261 = vld [vmem:[%s234 + $0x8] sm:$0xff]
        %v262 = vld [vmem:[%s234 + $0x10] sm:$0xff]
        %v263 = vld [vmem:[%s234 + $0x18] sm:$0xff]
        %v264 = vld [vmem:[%s240] sm:$0xff]
        %v265 = vld [vmem:[%s240 + $0x8] sm:$0xff]
        %v266 = vld [vmem:[%s240 + $0x10] sm:$0xff]
        %v267 = vld [vmem:[%s240 + $0x18] sm:$0xff]
        %s268 = smul.u32 %s24, 3
        %s269 = smul.addr %s268, 4
        %s270 = scalar_lea.vmem %s1, %s269
        %v271 = vld [vmem:[%s270] sm:$0x77]
        %v272 = vld [vmem:[%s270 + $0x8] sm:$0x7]
        %274 = vset.pattern.permute.xlu0 0
        %275 = vperm.xlu0 %274, %v260
        %v276 = vpop.permute.xlu0 %275
        %279 = vset.pattern.permute.xlu0 0
        %280 = vperm.xlu0 %279, %v261
        %v281 = vpop.permute.xlu0 %280
        %284 = vset.pattern.permute.xlu0 0
        %285 = vperm.xlu0 %284, %v262
        %v286 = vpop.permute.xlu0 %285
        %289 = vset.pattern.permute.xlu0 0
        %290 = vperm.xlu0 %289, %v263
        %v291 = vpop.permute.xlu0 %290
        %v295 = vperm.slane %v271, 0
        %v296 = vperm.slane %v271, 4
        %v297 = vperm.slane %v272, 0
        %v301 = vperm.slane %v295, 0
        %v302 = vperm.slane %v296, 0
        %v303 = vperm.slane %v297, 0
        %v304 = vsub.f32 %v276, %v301
        %v305 = vsub.f32 %v276, %v302
        %v306 = vsub.f32 %v276, %v303
        %v307 = vsub.f32 %v281, %v301
        %v308 = vsub.f32 %v281, %v302
        %v309 = vsub.f32 %v281, %v303
        %v310 = vsub.f32 %v286, %v301
        %v311 = vsub.f32 %v286, %v302
        %v312 = vsub.f32 %v286, %v303
        %v313 = vsub.f32 %v291, %v301
        %v314 = vsub.f32 %v291, %v302
        %v315 = vsub.f32 %v291, %v303
        %v316 = vmul.f32 %v304, %v304
        %v317 = vmul.f32 %v305, %v305
        %v318 = vmul.f32 %v306, %v306
        %v319 = vmul.f32 %v307, %v307
        %v320 = vmul.f32 %v308, %v308
        %v321 = vmul.f32 %v309, %v309
        %v322 = vmul.f32 %v310, %v310
        %v323 = vmul.f32 %v311, %v311
        %v324 = vmul.f32 %v312, %v312
        %v325 = vmul.f32 %v313, %v313
        %v326 = vmul.f32 %v314, %v314
        %v327 = vmul.f32 %v315, %v315
        %328 = vset.pattern.permute.xlu0 1
        %329 = vperm.xlu0 %328, %v260
        %v330 = vpop.permute.xlu0 %329
        %332 = vset.pattern.permute.xlu0 1
        %333 = vperm.xlu0 %332, %v261
        %v334 = vpop.permute.xlu0 %333
        %336 = vset.pattern.permute.xlu0 1
        %337 = vperm.xlu0 %336, %v262
        %v338 = vpop.permute.xlu0 %337
        %340 = vset.pattern.permute.xlu0 1
        %341 = vperm.xlu0 %340, %v263
        %v342 = vpop.permute.xlu0 %341
        %v344 = vperm.slane %v271, 1
        %v345 = vperm.slane %v271, 5
        %v346 = vperm.slane %v272, 1
        %v350 = vperm.slane %v344, 1
        %v351 = vperm.slane %v345, 1
        %v352 = vperm.slane %v346, 1
        %v353 = vsub.f32 %v330, %v350
        %v354 = vsub.f32 %v330, %v351
        %v355 = vsub.f32 %v330, %v352
        %v356 = vsub.f32 %v334, %v350
        %v357 = vsub.f32 %v334, %v351
        %v358 = vsub.f32 %v334, %v352
        %v359 = vsub.f32 %v338, %v350
        %v360 = vsub.f32 %v338, %v351
        %v361 = vsub.f32 %v338, %v352
        %v362 = vsub.f32 %v342, %v350
        %v363 = vsub.f32 %v342, %v351
        %v364 = vsub.f32 %v342, %v352
        %v365 = vmul.f32 %v353, %v353
        %v366 = vmul.f32 %v354, %v354
        %v367 = vmul.f32 %v355, %v355
        %v368 = vmul.f32 %v356, %v356
        %v369 = vmul.f32 %v357, %v357
        %v370 = vmul.f32 %v358, %v358
        %v371 = vmul.f32 %v359, %v359
        %v372 = vmul.f32 %v360, %v360
        %v373 = vmul.f32 %v361, %v361
        %v374 = vmul.f32 %v362, %v362
        %v375 = vmul.f32 %v363, %v363
        %v376 = vmul.f32 %v364, %v364
        %v377 = vadd.f32 %v316, %v365
        %v378 = vadd.f32 %v317, %v366
        %v379 = vadd.f32 %v318, %v367
        %v380 = vadd.f32 %v319, %v368
        %v381 = vadd.f32 %v320, %v369
        %v382 = vadd.f32 %v321, %v370
        %v383 = vadd.f32 %v322, %v371
        %v384 = vadd.f32 %v323, %v372
        %v385 = vadd.f32 %v324, %v373
        %v386 = vadd.f32 %v325, %v374
        %v387 = vadd.f32 %v326, %v375
        %v388 = vadd.f32 %v327, %v376
        %389 = vset.pattern.permute.xlu0 2
        %390 = vperm.xlu0 %389, %v260
        %v391 = vpop.permute.xlu0 %390
        %393 = vset.pattern.permute.xlu0 2
        %394 = vperm.xlu0 %393, %v261
        %v395 = vpop.permute.xlu0 %394
        %397 = vset.pattern.permute.xlu0 2
        %398 = vperm.xlu0 %397, %v262
        %v399 = vpop.permute.xlu0 %398
        %401 = vset.pattern.permute.xlu0 2
        %402 = vperm.xlu0 %401, %v263
        %v403 = vpop.permute.xlu0 %402
        %v405 = vperm.slane %v271, 2
        %v406 = vperm.slane %v271, 6
        %v407 = vperm.slane %v272, 2
        %v411 = vperm.slane %v405, 2
        %v412 = vperm.slane %v406, 2
        %v413 = vperm.slane %v407, 2
        %v414 = vsub.f32 %v391, %v411
        %v415 = vsub.f32 %v391, %v412
        %v416 = vsub.f32 %v391, %v413
        %v417 = vsub.f32 %v395, %v411
        %v418 = vsub.f32 %v395, %v412
        %v419 = vsub.f32 %v395, %v413
        %v420 = vsub.f32 %v399, %v411
        %v421 = vsub.f32 %v399, %v412
        %v422 = vsub.f32 %v399, %v413
        %v423 = vsub.f32 %v403, %v411
        %v424 = vsub.f32 %v403, %v412
        %v425 = vsub.f32 %v403, %v413
        %v426 = vmul.f32 %v414, %v414
        %v427 = vmul.f32 %v415, %v415
        %v428 = vmul.f32 %v416, %v416
        %v429 = vmul.f32 %v417, %v417
        %v430 = vmul.f32 %v418, %v418
        %v431 = vmul.f32 %v419, %v419
        %v432 = vmul.f32 %v420, %v420
        %v433 = vmul.f32 %v421, %v421
        %v434 = vmul.f32 %v422, %v422
        %v435 = vmul.f32 %v423, %v423
        %v436 = vmul.f32 %v424, %v424
        %v437 = vmul.f32 %v425, %v425
        %v438 = vadd.f32 %v377, %v426
        %v439 = vadd.f32 %v378, %v427
        %v440 = vadd.f32 %v379, %v428
        %v441 = vadd.f32 %v380, %v429
        %v442 = vadd.f32 %v381, %v430
        %v443 = vadd.f32 %v382, %v431
        %v444 = vadd.f32 %v383, %v432
        %v445 = vadd.f32 %v384, %v433
        %v446 = vadd.f32 %v385, %v434
        %v447 = vadd.f32 %v386, %v435
        %v448 = vadd.f32 %v387, %v436
        %v449 = vadd.f32 %v388, %v437
        %451 = vset.pattern.permute.xlu0 0
        %452 = vperm.xlu0 %451, %v264
        %v453 = vpop.permute.xlu0 %452
        %456 = vset.pattern.permute.xlu0 0
        %457 = vperm.xlu0 %456, %v265
        %v458 = vpop.permute.xlu0 %457
        %461 = vset.pattern.permute.xlu0 0
        %462 = vperm.xlu0 %461, %v266
        %v463 = vpop.permute.xlu0 %462
        %466 = vset.pattern.permute.xlu0 0
        %467 = vperm.xlu0 %466, %v267
        %v468 = vpop.permute.xlu0 %467
        %vm470 = vcmp.le.f32.partialorder %v438, %v453
        %vm471 = vcmp.le.f32.partialorder %v439, %v453
        %vm472 = vcmp.le.f32.partialorder %v440, %v453
        %vm473 = vcmp.le.f32.partialorder %v441, %v458
        %vm474 = vcmp.le.f32.partialorder %v442, %v458
        %vm475 = vcmp.le.f32.partialorder %v443, %v458
        %vm476 = vcmp.le.f32.partialorder %v444, %v463
        %vm477 = vcmp.le.f32.partialorder %v445, %v463
        %vm478 = vcmp.le.f32.partialorder %v446, %v463
        %vm479 = vcmp.le.f32.partialorder %v447, %v468
        %vm480 = vcmp.le.f32.partialorder %v448, %v468
        %vm481 = vcmp.le.f32.partialorder %v449, %v468
        %vm482 = vmpackc.low %vm473, %vm470
        %vm483 = vmpackc.low %vm479, %vm476
        %v484 = vsel %vm482, 16711935, 0
        %v485 = vsel %vm483, 16711935, 0
        %v486 = vpack.c.b8 %v485, %v484
        %vm487 = vnez %v486
        %vm488 = vmpackc.low %vm474, %vm471
        %vm489 = vmpackc.low %vm480, %vm477
        %v490 = vsel %vm488, 16711935, 0
        %v491 = vsel %vm489, 16711935, 0
        %v492 = vpack.c.b8 %v491, %v490
        %vm493 = vnez %v492
        %vm494 = vmpackc.low %vm475, %vm472
        %vm495 = vmpackc.low %vm481, %vm478
        %v496 = vsel %vm494, 16711935, 0
        %v497 = vsel %vm495, 16711935, 0
        %v498 = vpack.c.b8 %v497, %v496
        %vm499 = vnez %v498
        %v500 = vsel %vm487, 16843009, 0
        %v501 = vsel %vm493, 16843009, 0
        %v502 = vsel %vm499, 16843009, 0
        %503 = vst [vmem:[%s222] sm:$0xff] %v500
        %504 = vst [vmem:[%s222 + $0x8] sm:$0xff] %v501
        %505 = vst [vmem:[%s222 + $0x10] sm:$0xff] %v502
        %v506 = vld [vmem:[%s247] sm:$0xff]
        %v507 = vld [vmem:[%s247 + $0x8] sm:$0xff]
        %v508 = vld [vmem:[%s247 + $0x10] sm:$0xff]
        %v509 = vld [vmem:[%s247 + $0x18] sm:$0xff]
        %v510 = vsel %vm470, 1, 0
        %v511 = vsel %vm471, 1, 0
        %v512 = vsel %vm472, 1, 0
        %v513 = vsel %vm473, 1, 0
        %v514 = vsel %vm474, 1, 0
        %v515 = vsel %vm475, 1, 0
        %v516 = vsel %vm476, 1, 0
        %v517 = vsel %vm477, 1, 0
        %v518 = vsel %vm478, 1, 0
        %v519 = vsel %vm479, 1, 0
        %v520 = vsel %vm480, 1, 0
        %v521 = vsel %vm481, 1, 0
        %v522 = vadd.s32 %v510, %v511
        %v523 = vadd.s32 %v522, %v512
        %v524 = vand.u32 %v523, 65535
        %v525 = vshrl.u32 %v523, 16
        %v526 = vcvt.s32.f32 %v524
        %v527 = vcvt.s32.f32 %v525
        %528 = vadd.xlane.f32.xlu0 %v526
        %v529 = vpop.xlane.xlu0 %528
        %530 = vadd.xlane.f32.xlu0 %v527
        %v531 = vpop.xlane.xlu0 %530
        %v532 = vcvt.f32.s32 %v529
        %v533 = vcvt.f32.s32 %v531
        %v534 = vshll.u32 %v533, 16
        %v535 = vadd.s32 %v534, %v532
        %v536 = vadd.s32 %v513, %v514
        %v537 = vadd.s32 %v536, %v515
        %v538 = vand.u32 %v537, 65535
        %v539 = vshrl.u32 %v537, 16
        %v540 = vcvt.s32.f32 %v538
        %v541 = vcvt.s32.f32 %v539
        %542 = vadd.xlane.f32.xlu0 %v540
        %v543 = vpop.xlane.xlu0 %542
        %544 = vadd.xlane.f32.xlu0 %v541
        %v545 = vpop.xlane.xlu0 %544
        %v546 = vcvt.f32.s32 %v543
        %v547 = vcvt.f32.s32 %v545
        %v548 = vshll.u32 %v547, 16
        %v549 = vadd.s32 %v548, %v546
        %v550 = vadd.s32 %v516, %v517
        %v551 = vadd.s32 %v550, %v518
        %v552 = vand.u32 %v551, 65535
        %v553 = vshrl.u32 %v551, 16
        %v554 = vcvt.s32.f32 %v552
        %v555 = vcvt.s32.f32 %v553
        %556 = vadd.xlane.f32.xlu0 %v554
        %v557 = vpop.xlane.xlu0 %556
        %558 = vadd.xlane.f32.xlu0 %v555
        %v559 = vpop.xlane.xlu0 %558
        %v560 = vcvt.f32.s32 %v557
        %v561 = vcvt.f32.s32 %v559
        %v562 = vshll.u32 %v561, 16
        %v563 = vadd.s32 %v562, %v560
        %v564 = vadd.s32 %v519, %v520
        %v565 = vadd.s32 %v564, %v521
        %v566 = vand.u32 %v565, 65535
        %v567 = vshrl.u32 %v565, 16
        %v568 = vcvt.s32.f32 %v566
        %v569 = vcvt.s32.f32 %v567
        %570 = vadd.xlane.f32.xlu0 %v568
        %v571 = vpop.xlane.xlu0 %570
        %572 = vadd.xlane.f32.xlu0 %v569
        %v573 = vpop.xlane.xlu0 %572
        %v574 = vcvt.f32.s32 %v571
        %v575 = vcvt.f32.s32 %v573
        %v576 = vshll.u32 %v575, 16
        %v577 = vadd.s32 %v576, %v574
        %v578 = vadd.s32 %v506, %v535
        %v579 = vadd.s32 %v507, %v549
        %v580 = vadd.s32 %v508, %v563
        %v581 = vadd.s32 %v509, %v577
        %vm582 = vcmask 7168
        %583 = vst.msk [vmem:[%s247] sm:$0xff] %vm582, %v578
        %584 = vst.msk [vmem:[%s247 + $0x8] sm:$0xff] %vm582, %v579
        %585 = vst.msk [vmem:[%s247 + $0x10] sm:$0xff] %vm582, %v580
        %586 = vst.msk [vmem:[%s247 + $0x18] sm:$0xff] %vm582, %v581
        %s587 = sand.u32 %s114, 1
        %s588 = scalar_lea.sflag [#allocation3], %s587
        %s589 = sand.u32 %s114, 1
        %s590 = smul.addr %s589, 24
        %s591 = scalar_lea.vmem [#allocation2], %s590
        %s592 = smul.u32 4, %s23
        %p593 = scmp.lt.s32.totalorder %s592, 11
        %s594 = scalar_select %p593, %s592, 11
        %s595 = smul.addr %s594, 8
        %s596 = scalar_lea.vmem %s4, %s595
        // Predicated region
        $region37: #{tpu_custom_call.1} parent=31 // pred_check
          %p597 = pneg %p124
        $region38: #{tpu_custom_call.1} parent=31 // pred_check_branch
          %599 = sbr.rel (%p597) target = $region40
        $region39: #{tpu_custom_call.1} parent=31 // pred_region
          %s600 = smul.u32 3, %s24
          %602 = vsyncadd %s588, 0
          %s603 = smul.addr %s23, 3
          %s604 = sadd.s32 %s600, %s603
          %s605 = smul.addr %s604, 8
          %s606 = scalar_lea.hbm %s3, %s605
          %s608 = sshll.u32 %s591, 4
          %s609 = int_to_ptr.vmem [resolvable:$true] %s608
          %s610 = sshll.u32 %s606, 4
          %s611 = int_to_ptr.hbm [resolvable:$true] %s610
          %613 = dma.vmem_to_hbm [thread:$0]  %s609, 384, %s611, %s588
        $region40: #{tpu_custom_call.1} parent=31 // pred_fallthru
          _
        // Predicated region
        $region41: #{tpu_custom_call.1} parent=31 // pred_check
          %p614 = pneg %p150
        $region42: #{tpu_custom_call.1} parent=31 // pred_check_branch
          %616 = sbr.rel (%p614) target = $region44
        $region43: #{tpu_custom_call.1} parent=31 // pred_region
          %s617 = smul.u32 4, %s23
        $region44: #{tpu_custom_call.1} parent=31 // pred_fallthru
          _
      $region32: #{tpu_custom_call.1} parent=5 // pred_fallthru
        _
      %p618 = scmp.le.s32.totalorder 2, %s14
      // Predicated region
      $region45: #{tpu_custom_call.1} parent=5 // pred_check
        %p619 = pneg %p618
      $region46: #{tpu_custom_call.1} parent=5 // pred_check_branch
        %621 = sbr.rel (%p619) target = $region48
      $region47: #{tpu_custom_call.1} parent=5 // pred_region
        %s622 = ssub.s32 %s14, 2
        // Predicated region
        $region49: #{tpu_custom_call.1} parent=47 // pred_check
          %p623 = pneg %p130
        $region50: #{tpu_custom_call.1} parent=47 // pred_check_branch
          %625 = sbr.rel (%p623) target = $region52
        $region51: #{tpu_custom_call.1} parent=47 // pred_region
          %s626 = sand.u32 %s115, 1
          %s627 = scalar_lea.sflag [#allocation3], %s626
          %s628 = sand.u32 %s115, 1
          %s629 = smul.addr %s628, 24
          %s630 = scalar_lea.vmem [#allocation2], %s629
          %632 = dma.done %s627, 384
        $region52: #{tpu_custom_call.1} parent=47 // pred_fallthru
          _
        // Predicated region
        $region53: #{tpu_custom_call.1} parent=47 // pred_check
          %p633 = pneg %p156
        $region54: #{tpu_custom_call.1} parent=47 // pred_check_branch
          %635 = sbr.rel (%p633) target = $region56
        $region55: #{tpu_custom_call.1} parent=47 // pred_region
          %s636 = smul.u32 4, %s25
          %p637 = scmp.lt.s32.totalorder %s636, 11
          %s638 = scalar_select %p637, %s636, 11
          %s639 = smul.addr %s638, 8
          %s640 = scalar_lea.vmem %s4, %s639
        $region56: #{tpu_custom_call.1} parent=47 // pred_fallthru
          _
      $region48: #{tpu_custom_call.1} parent=5 // pred_fallthru
        _
    $region6: #{tpu_custom_call.1} parent=1 // loop_footer
      %s18 = sadd.s32 1, %s14
    $region7: #{tpu_custom_call.1} parent=1 // loop_footer_branch
      %13 = sbr.rel target = $region3
    $region8: #{tpu_custom_call.1} parent=1 // loop_exit
      _
    %641 = vsyncpa [#allocation3], 1
    %s642 = scalar_lea.sflag [#allocation3], 1
    %643 = vsyncpa %s642, 1

</llo_original>
